<compile_context>
chip_gen: v7x
topology: tpu7x:2x2x1
jax: 0.10.0
libtpu: 0.0.40
codegen_flags: <defaults>
</compile_context>

<pallas_src>
import functools

import jax
import jax.numpy as jnp
from jax import lax
from jax.experimental import pallas as pl
from jax.experimental.pallas import tpu as pltpu

GAMMA = 2.0
ALPHA = 0.25


def _focal_loss_kernel(x_ref, t_ref, psum_ref, *, total_elems, padded_total,
                       tile_rows, lanes):
    x = x_ref[...].astype(jnp.float32)
    t = t_ref[...].astype(jnp.float32)

    # One exp per element, shared by the BCE log-term and the sigmoid.
    e = jnp.exp(-jnp.abs(x))                      # EUP exp
    log_term = jnp.log1p(e)                       # EUP log
    r = pl.reciprocal(1.0 + e, approx=True)       # EUP vrcp (approx), no exact divide
    probs = jnp.where(x >= 0.0, r, e * r)         # == sigmoid(x)

    # Numerically stable BCE-with-logits (matches nn.BCEWithLogitsLoss, 'none'):
    #   bce = max(x, 0) - x*t + log(1 + exp(-|x|))
    bce = jnp.maximum(x, 0.0) - x * t + log_term

    # Matches the PyTorch module: exact `targets == 1` selection (hard 0/1 labels).
    is_pos = t == 1.0
    p_t = jnp.where(is_pos, probs, 1.0 - probs)
    alpha_factor = jnp.where(is_pos, ALPHA, 1.0 - ALPHA)
    q = 1.0 - p_t
    if GAMMA == 2.0:
        mod = q * q                               # avoid pow -> 2 fewer EUP ops/elem
    else:
        mod = q ** GAMMA
    focal = alpha_factor * mod * bce

    if padded_total != total_elems:
        # Mask out padded tail elements so they don't contribute to the sum.
        i = pl.program_id(0)
        row_ids = lax.broadcasted_iota(jnp.int32, (tile_rows, lanes), 0)
        lane_ids = lax.broadcasted_iota(jnp.int32, (tile_rows, lanes), 1)
        flat_idx = (i * tile_rows + row_ids) * lanes + lane_ids
        focal = jnp.where(flat_idx < total_elems, focal, 0.0)

    # VPU-only partial reduce: fold groups of 8 sublanes into one (8,128) slab.
    # The cross-lane reduce is deferred to the (tiny) JAX-side jnp.sum.
    psum_ref[...] = focal.reshape(tile_rows // 8, 8, lanes).sum(axis=0)


def focal_loss_mean(inputs, targets, *, tile_rows=2048, lanes=128, input_dtype=None):
    """Focal loss with reduction='mean' (gamma=2.0, alpha=0.25)."""
    assert inputs.shape == targets.shape
    total = inputs.size

    x = inputs.reshape(-1)
    t = targets.reshape(-1)
    if input_dtype is not None:
        # Optional bandwidth saver for v5e/v6e (kernel upcasts to f32 internally).
        x = x.astype(input_dtype)
        t = t.astype(input_dtype)

    rows = (total + lanes - 1) // lanes
    rows8 = ((rows + 7) // 8) * 8                 # sublane granularity
    tr = max(8, min(tile_rows, rows8))            # clamp tile to problem size
    tr = ((tr + 7) // 8) * 8
    num_blocks = (rows8 + tr - 1) // tr
    padded_rows = num_blocks * tr
    padded_total = padded_rows * lanes

    if padded_total != total:
        pad = padded_total - total
        x = jnp.pad(x, (0, pad))
        t = jnp.pad(t, (0, pad))
    x2 = x.reshape(padded_rows, lanes)
    t2 = t.reshape(padded_rows, lanes)

    kernel = functools.partial(
        _focal_loss_kernel,
        total_elems=total,
        padded_total=padded_total,
        tile_rows=tr,
        lanes=lanes,
    )

    partials = pl.pallas_call(
        kernel,
        out_shape=jax.ShapeDtypeStruct((num_blocks * 8, lanes), jnp.float32),
        grid_spec=pltpu.PrefetchScalarGridSpec(
            num_scalar_prefetch=0,
            grid=(num_blocks,),
            in_specs=[
                pl.BlockSpec((tr, lanes), lambda i: (i, 0)),
                pl.BlockSpec((tr, lanes), lambda i: (i, 0)),
            ],
            out_specs=pl.BlockSpec((8, lanes), lambda i: (i, 0)),
        ),
        compiler_params=pltpu.CompilerParams(
            # Independent blocks -> parallel axis (both TensorCores on v7x).
            dimension_semantics=("parallel",),
        ),
    )(x2, t2)

    # Tiny final reduction (num_blocks * 8 * 128 f32) + 'mean'.
    return jnp.sum(partials) / total


def focal_loss_ref(inputs, targets):
    x = inputs.astype(jnp.float32)
    t = targets.astype(jnp.float32)
    bce = jnp.maximum(x, 0.0) - x * t + jnp.log1p(jnp.exp(-jnp.abs(x)))
    probs = jax.nn.sigmoid(x)
    p_t = jnp.where(t == 1.0, probs, 1.0 - probs)
    alpha_factor = jnp.where(t == 1.0, ALPHA, 1.0 - ALPHA)
    return jnp.mean(alpha_factor * (1.0 - p_t) ** GAMMA * bce)


if __name__ == "__main__":
    key = jax.random.PRNGKey(0)
    k1, k2 = jax.random.split(key)
    shape = (2, 4, 16, 16)  # NCHW
    logits = jax.random.normal(k1, shape, dtype=jnp.float32)
    targets = jax.random.bernoulli(k2, 0.3, shape).astype(jnp.float32)

    loss = focal_loss_mean(logits, targets)
    loss = jax.block_until_ready(loss)

    ref = focal_loss_ref(logits, targets)
    # Tolerance accounts for the approximate EUP reciprocal in the in-kernel sigmoid.
    assert jnp.allclose(loss, ref, rtol=1e-3, atol=1e-5), (loss, ref)
    print("KERNEL_OK")
</pallas_src>

<mosaic_0001>
module attributes {stable_mosaic.version = 11 : i64} {
  func.func @_focal_loss_kernel(%arg0: i32, %arg1: memref<16x128xf32, #tpu.memory_space<vmem>>, %arg2: memref<16x128xf32, #tpu.memory_space<vmem>>, %arg3: memref<8x128xf32, #tpu.memory_space<vmem>>) attributes {dimension_semantics = [#tpu.dimension_semantics<parallel>], iteration_bounds = array<i64: 1>, scalar_prefetch = 0 : i64, scratch_operands = 0 : i64, tpu.core_type = #tpu.core_type<tc>, window_params = [{transform_indices = @transform_0, window_bounds = array<i64: 16, 128>}, {transform_indices = @transform_1, window_bounds = array<i64: 16, 128>}, {transform_indices = @transform_2, window_bounds = array<i64: 8, 128>}]} {
    %c0 = arith.constant 0 : index
    %c0_0 = arith.constant 0 : index
    %0 = vector.load %arg1[%c0, %c0_0] : memref<16x128xf32, #tpu.memory_space<vmem>>, vector<16x128xf32>
    %c0_1 = arith.constant 0 : index
    %c0_2 = arith.constant 0 : index
    %1 = vector.load %arg2[%c0_1, %c0_2] : memref<16x128xf32, #tpu.memory_space<vmem>>, vector<16x128xf32>
    %2 = math.absf %0 : vector<16x128xf32>
    %cst = arith.constant 0.000000e+00 : f32
    %3 = vector.broadcast %cst : f32 to vector<16x128xf32>
    %4 = arith.subf %3, %2 : vector<16x128xf32>
    %5 = math.exp %4 : vector<16x128xf32>
    %6 = math.log1p %5 : vector<16x128xf32>
    %cst_3 = arith.constant 1.000000e+00 : f32
    %7 = vector.broadcast %cst_3 : f32 to vector<16x128xf32>
    %8 = arith.addf %7, %5 : vector<16x128xf32>
    %9 = tpu.reciprocal %8 {approx = true} : vector<16x128xf32> -> vector<16x128xf32>
    %cst_4 = arith.constant 0.000000e+00 : f32
    %10 = vector.broadcast %cst_4 : f32 to vector<16x128xf32>
    %11 = arith.cmpf oge, %0, %10 : vector<16x128xf32>
    %12 = arith.mulf %5, %9 : vector<16x128xf32>
    %13 = arith.select %11, %9, %12 : vector<16x128xi1>, vector<16x128xf32>
    %cst_5 = arith.constant 0.000000e+00 : f32
    %14 = vector.broadcast %cst_5 : f32 to vector<16x128xf32>
    %15 = arith.maximumf %0, %14 : vector<16x128xf32>
    %16 = arith.mulf %0, %1 : vector<16x128xf32>
    %17 = arith.subf %15, %16 : vector<16x128xf32>
    %18 = arith.addf %17, %6 : vector<16x128xf32>
    %cst_6 = arith.constant 1.000000e+00 : f32
    %19 = vector.broadcast %cst_6 : f32 to vector<16x128xf32>
    %20 = arith.cmpf oeq, %1, %19 : vector<16x128xf32>
    %cst_7 = arith.constant 1.000000e+00 : f32
    %21 = vector.broadcast %cst_7 : f32 to vector<16x128xf32>
    %22 = arith.subf %21, %13 : vector<16x128xf32>
    %23 = arith.select %20, %13, %22 : vector<16x128xi1>, vector<16x128xf32>
    %cst_8 = arith.constant 2.500000e-01 : f32
    %cst_9 = arith.constant 7.500000e-01 : f32
    %24 = vector.broadcast %cst_8 : f32 to vector<16x128xf32>
    %25 = vector.broadcast %cst_9 : f32 to vector<16x128xf32>
    %26 = arith.select %20, %24, %25 : vector<16x128xi1>, vector<16x128xf32>
    %cst_10 = arith.constant 1.000000e+00 : f32
    %27 = vector.broadcast %cst_10 : f32 to vector<16x128xf32>
    %28 = arith.subf %27, %23 : vector<16x128xf32>
    %29 = arith.mulf %28, %28 : vector<16x128xf32>
    %30 = arith.mulf %26, %29 : vector<16x128xf32>
    %31 = arith.mulf %30, %18 : vector<16x128xf32>
    %32 = vector.shape_cast %31 : vector<16x128xf32> to vector<2x8x128xf32>
    %cst_11 = arith.constant dense<0.000000e+00> : vector<8x128xf32>
    %33 = vector.multi_reduction <add>, %32, %cst_11 [0] : vector<2x8x128xf32> to vector<8x128xf32>
    %c0_12 = arith.constant 0 : index
    %c0_13 = arith.constant 0 : index
    %34 = vector.load %arg3[%c0_12, %c0_13] : memref<8x128xf32, #tpu.memory_space<vmem>>, vector<8x128xf32>
    tpu.vector_store %arg3[%c0_12, %c0_13], %33 {strides = array<i32>} : memref<8x128xf32, #tpu.memory_space<vmem>>, vector<8x128xf32>,
    return
  }
  func.func @transform_0(%arg0: i32) -> (i32, i32) {
    %c0_i32 = arith.constant 0 : i32
    %c0_i32_0 = arith.constant 0 : i32
    return %arg0, %c0_i32 : i32, i32
  }
  func.func @transform_1(%arg0: i32) -> (i32, i32) {
    %c0_i32 = arith.constant 0 : i32
    %c0_i32_0 = arith.constant 0 : i32
    return %arg0, %c0_i32 : i32, i32
  }
  func.func @transform_2(%arg0: i32) -> (i32, i32) {
    %c0_i32 = arith.constant 0 : i32
    %c0_i32_0 = arith.constant 0 : i32
    return %arg0, %c0_i32 : i32, i32
  }
}

</mosaic_0001>

<llo_original>
// kernel: tpu_custom_call.1
$region0: #{tpu_custom_call.1}
  #allocation0 [shape = 'u32[]', space=smem, size = 0x4, offset = 0x4, fixed_abs, tag = 'smem constant byte address 0x4 - core index']
  #allocation1 [shape = 'u32[144,128]{1,0:T(1,128)}', space=vmem, size = 0x12000, scoped, tag = 'internal scratch']
  %s0 = inlined_call_operand.hbm [shape: f32[16,128], index: 0, kind: input, shape index: {}]
  %s1 = inlined_call_operand.hbm [shape: f32[16,128], index: 1, kind: input, shape index: {}]
  %s2 = inlined_call_operand.hbm [shape: f32[8,128], index: 2, kind: output, shape index: {}]
  %s3 = sld [smem:[#allocation0]]
  $region26: #{tpu_custom_call.1} parent=0
    _
  %s5 = ssub.s32 1, %s3
  %s6 = scalar_select 0, %s5, %s3
  $region1: #{tpu_custom_call.1} parent=0
    #allocation2 [shape = 'u8[8192]{0}', space=vmem, size = 0x2000, scoped, tag = 'input window, operand 0, single buffered']
    #allocation3 [shape = 's32[1]{0}', space=sflag, size = 0x4, scoped, tag = 'scoped memory for tpu_custom_call.1']
    #allocation4 [shape = 's32[1]{0}', space=sflag, size = 0x4, scoped, tag = 'scoped memory for tpu_custom_call.1']
    #allocation5 [shape = 'u8[8192]{0}', space=vmem, size = 0x2000, scoped, tag = 'input window, operand 1, single buffered']
    #allocation6 [shape = 's32[1]{0}', space=sflag, size = 0x4, scoped, tag = 'scoped memory for tpu_custom_call.1']
    #allocation7 [shape = 'u8[4096]{0}', space=vmem, size = 0x1000, scoped, tag = 'output window, operand 0, single buffered']
    %7 = vsyncpa [#allocation3], 0
    %8 = vsyncpa [#allocation6], 0
    %9 = vsyncpa [#allocation4], 0
    // Predicated region
    $region2: #{tpu_custom_call.1} parent=1 // pred_check
      _
    $region3: #{tpu_custom_call.1} parent=1 // pred_check_branch
      %11 = sbr.rel (0) target = $region5
    $region4: #{tpu_custom_call.1} parent=1 // pred_region
      %s13 = ssub.s32 256, 256
      %14 = vsyncadd [#allocation3], %s13
      %s15 = sshll.u32 [#allocation2], 4
      %s16 = int_to_ptr.vmem [resolvable:$true] %s15
      %21 = dma.hbm_to_vmem [thread:$0]  %s0, 256, %s16, [#allocation3], 128, 128, 8
    $region5: #{tpu_custom_call.1} parent=1 // pred_fallthru
      _
    // Predicated region
    $region6: #{tpu_custom_call.1} parent=1 // pred_check
      _
    $region7: #{tpu_custom_call.1} parent=1 // pred_check_branch
      %23 = sbr.rel (0) target = $region9
    $region8: #{tpu_custom_call.1} parent=1 // pred_region
      %s25 = ssub.s32 256, 256
      %26 = vsyncadd [#allocation6], %s25
      %s27 = sshll.u32 [#allocation5], 4
      %s28 = int_to_ptr.vmem [resolvable:$true] %s27
      %33 = dma.hbm_to_vmem [thread:$0]  %s1, 256, %s28, [#allocation6], 128, 128, 8
    $region9: #{tpu_custom_call.1} parent=1 // pred_fallthru
      _
    // Predicated region
    $region10: #{tpu_custom_call.1} parent=1 // pred_check
      _
    $region11: #{tpu_custom_call.1} parent=1 // pred_check_branch
      %35 = sbr.rel (0) target = $region13
    $region12: #{tpu_custom_call.1} parent=1 // pred_region
      %36 = dma.done [#allocation3], 256
    $region13: #{tpu_custom_call.1} parent=1 // pred_fallthru
      _
    // Predicated region
    $region14: #{tpu_custom_call.1} parent=1 // pred_check
      _
    $region15: #{tpu_custom_call.1} parent=1 // pred_check_branch
      %38 = sbr.rel (0) target = $region17
    $region16: #{tpu_custom_call.1} parent=1 // pred_region
      %39 = dma.done [#allocation6], 256
    $region17: #{tpu_custom_call.1} parent=1 // pred_fallthru
      _
    %v40 = vld [vmem:[#allocation2] sm:$0xff]
    %v41 = vld [vmem:[#allocation2 + $0x8] sm:$0xff]
    %v42 = vld [vmem:[#allocation5] sm:$0xff]
    %v43 = vld [vmem:[#allocation5 + $0x8] sm:$0xff]
    %v44 = vand.u32 2147483647, %v40
    %v45 = vand.u32 2147483647, %v41
    %v46 = vsub.f32 0.0, %v44
    %v47 = vsub.f32 0.0, %v45
    %v48 = vmul.f32 %v46, 1.442695
    %v49 = vpow.pop %v48
    %v50 = vmul.f32 %v47, 1.442695
    %v51 = vpow.pop %v50
    %v52 = vadd.f32 %v49, 1.0
    %v53 = vlog2.pop %v52
    %v54 = vmul.f32 %v53, 0.6931472
    %v55 = vmul.f32 -0.5, %v49
    %v56 = vadd.f32 %v55, 1.0
    %v57 = vmul.f32 %v56, %v49
    %v58 = vand.u32 2147483647, %v49
    %vm59 = vcmp.lt.f32.partialorder %v58, 0.0004427343
    %v60 = vsel %vm59, %v57, %v54
    %v61 = vadd.f32 %v51, 1.0
    %v62 = vlog2.pop %v61
    %v63 = vmul.f32 %v62, 0.6931472
    %v64 = vmul.f32 -0.5, %v51
    %v65 = vadd.f32 %v64, 1.0
    %v66 = vmul.f32 %v65, %v51
    %v67 = vand.u32 2147483647, %v51
    %vm68 = vcmp.lt.f32.partialorder %v67, 0.0004427343
    %v69 = vsel %vm68, %v66, %v63
    %v70 = vadd.f32 %v49, 1.0
    %v71 = vadd.f32 %v51, 1.0
    %v72 = vrcp.pop %v70
    %v73 = vrcp.pop %v71
    %vm74 = vcmp.ge.f32.partialorder %v40, 0.0
    %vm75 = vcmp.ge.f32.partialorder %v41, 0.0
    %v76 = vmul.f32 %v49, %v72
    %v77 = vmul.f32 %v51, %v73
    %v78 = vsel %vm74, %v72, %v76
    %v79 = vsel %vm75, %v73, %v77
    %v80 = vmax.f32 %v40, 0.0
    %v81 = vmax.f32 %v41, 0.0
    %v82 = vmul.f32 %v40, %v42
    %v83 = vmul.f32 %v41, %v43
    %v84 = vsub.f32 %v80, %v82
    %v85 = vsub.f32 %v81, %v83
    %v86 = vadd.f32 %v84, %v60
    %v87 = vadd.f32 %v85, %v69
    %vm88 = vcmp.eq.f32.partialorder %v42, 1.0
    %vm89 = vcmp.eq.f32.partialorder %v43, 1.0
    %v90 = vsub.f32 1.0, %v78
    %v91 = vsub.f32 1.0, %v79
    %v92 = vsel %vm88, %v78, %v90
    %v93 = vsel %vm89, %v79, %v91
    %v94 = vsel %vm88, 0.25, 0.75
    %v95 = vsel %vm89, 0.25, 0.75
    %v96 = vsub.f32 1.0, %v92
    %v97 = vsub.f32 1.0, %v93
    %v98 = vmul.f32 %v96, %v96
    %v99 = vmul.f32 %v97, %v97
    %v100 = vmul.f32 %v94, %v98
    %v101 = vmul.f32 %v95, %v99
    %v102 = vmul.f32 %v100, %v86
    %v103 = vmul.f32 %v101, %v87
    %v104 = vadd.f32 %v102, %v103
    %105 = vst [vmem:[#allocation7] sm:$0xff] %v104
    // Predicated region
    $region18: #{tpu_custom_call.1} parent=1 // pred_check
      _
    $region19: #{tpu_custom_call.1} parent=1 // pred_check_branch
      %107 = sbr.rel (0) target = $region21
    $region20: #{tpu_custom_call.1} parent=1 // pred_region
      %s109 = ssub.s32 128, 128
      %110 = vsyncadd [#allocation4], %s109
      %s112 = sshll.u32 [#allocation7], 4
      %s113 = int_to_ptr.vmem [resolvable:$true] %s112
      %115 = dma.vmem_to_hbm [thread:$0]  %s113, 128, %s2, [#allocation4]
    $region21: #{tpu_custom_call.1} parent=1 // pred_fallthru
      _
    // Predicated region
    $region22: #{tpu_custom_call.1} parent=1 // pred_check
      _
    $region23: #{tpu_custom_call.1} parent=1 // pred_check_branch
      %117 = sbr.rel (0) target = $region25
    $region24: #{tpu_custom_call.1} parent=1 // pred_region
      %118 = dma.done [#allocation4], 128
    $region25: #{tpu_custom_call.1} parent=1 // pred_fallthru
      _
    %119 = vsyncpa [#allocation3], 1
    %120 = vsyncpa [#allocation6], 1
    %121 = vsyncpa [#allocation4], 1

</llo_original>
